<compile_context>
chip_gen: v5e
topology: v5e:2x2
jax: 0.10.0
libtpu: 0.0.40
codegen_flags: <defaults>
</compile_context>

<pallas_src>
import functools

import jax
import jax.numpy as jnp
from jax.experimental import pallas as pl
from jax.experimental.pallas import tpu as pltpu

SUBLANE = 8  # sublane granularity for the batch dim


def _round_up(x, m):
    return (x + m - 1) // m * m


# ----------------------------------------------------------------------------
# Kernel
# ----------------------------------------------------------------------------
def _vae_kernel(x_ref, eps_ref,
                w1_ref, b1_ref,
                w2_ref, b2_ref,
                w3_ref, b3_ref,          # fused fc31|fc32: (64, 2*latent_dim)
                w4_ref, b4_ref,
                w5_ref, b5_ref,
                w6_ref, b6_ref,
                recon_ref, mu_ref, logvar_ref, z_ref,
                *, latent_dim):
    x = x_ref[...]

    # ---- encoder ----
    h1 = jnp.maximum(
        jnp.dot(x, w1_ref[...], preferred_element_type=jnp.float32)
        + b1_ref[...], 0.0)
    h2 = jnp.maximum(
        jnp.dot(h1, w2_ref[...], preferred_element_type=jnp.float32)
        + b2_ref[...], 0.0)

    # Fused mu/logvar head: one (TB,64) x (64, 2*latent_dim) matmul.
    head = jnp.dot(h2, w3_ref[...], preferred_element_type=jnp.float32) \
        + b3_ref[...]
    mu = head[:, :latent_dim]
    logvar = jnp.clip(head[:, latent_dim:], -5.0, 5.0)

    # ---- reparameterize: z = mu + eps * exp(0.5 * logvar) ----
    std = jnp.exp(0.5 * logvar)
    z = mu + eps_ref[...] * std

    # ---- decoder ----
    h4 = jnp.maximum(
        jnp.dot(z, w4_ref[...], preferred_element_type=jnp.float32)
        + b4_ref[...], 0.0)
    h5 = jnp.maximum(
        jnp.dot(h4, w5_ref[...], preferred_element_type=jnp.float32)
        + b5_ref[...], 0.0)
    recon = jnp.dot(h5, w6_ref[...], preferred_element_type=jnp.float32) \
        + b6_ref[...]

    recon_ref[...] = recon
    mu_ref[...] = mu
    logvar_ref[...] = logvar
    z_ref[...] = z


# ----------------------------------------------------------------------------
# Parameters
# ----------------------------------------------------------------------------
def make_params(key, input_dim, latent_dim):
    """Deterministic init (PyTorch nn.Linear-like uniform bounds)."""
    dims = [
        ("fc1", input_dim, 128),
        ("fc2", 128, 64),
        ("fc31", 64, latent_dim),
        ("fc32", 64, latent_dim),
        ("fc4", latent_dim, 64),
        ("fc5", 64, 128),
        ("fc6", 128, input_dim),
    ]
    params = {}
    for name, fan_in, fan_out in dims:
        key, kw, kb = jax.random.split(key, 3)
        bound = 1.0 / jnp.sqrt(jnp.float32(fan_in))
        params[name + "_w"] = jax.random.uniform(
            kw, (fan_in, fan_out), jnp.float32, -bound, bound)
        params[name + "_b"] = jax.random.uniform(
            kb, (1, fan_out), jnp.float32, -bound, bound)
    return params


def prepare_fused_params(params):
    """One-time parameter prep (hoisted out of the forward).

    Only fuses fc31|fc32 into a single (64, 2*latent_dim) head.  No feature
    padding anywhere: the kernel works on true widths.  Returns arrays only
    (safe to pass through jit).
    """
    w3 = jnp.concatenate([params["fc31_w"], params["fc32_w"]], axis=-1)
    b3 = jnp.concatenate([params["fc31_b"], params["fc32_b"]], axis=-1)
    return {
        "fc1_w": params["fc1_w"], "fc1_b": params["fc1_b"],
        "fc2_w": params["fc2_w"], "fc2_b": params["fc2_b"],
        "fc3_w": w3, "fc3_b": b3,
        "fc4_w": params["fc4_w"], "fc4_b": params["fc4_b"],
        "fc5_w": params["fc5_w"], "fc5_b": params["fc5_b"],
        "fc6_w": params["fc6_w"], "fc6_b": params["fc6_b"],
    }


# ----------------------------------------------------------------------------
# Tiling / VMEM heuristics
# ----------------------------------------------------------------------------
def _choose_batch_tile(B, max_tile):
    """Adaptive batch tile: multiple of 8, large (amortize ~0.35us/step), with
    limited padded-row waste, and >=2 grid steps when possible (v7x megacore)."""
    b8 = _round_up(B, SUBLANE)
    if b8 <= SUBLANE:
        return SUBLANE
    if b8 <= max_tile:
        # Small batch: split into (at most) 2 steps so the "parallel" batch
        # axis can shard across v7x's two TensorCores.
        if b8 >= 2 * SUBLANE:
            return _round_up((b8 + 1) // 2, SUBLANE)
        return b8
    # Large batch: pick among power-of-two tiles with a tiny cost model:
    # cost ~= n_steps * step_overhead + wasted_padded_rows * row_cost.
    candidates = [t for t in (2048, 1024, 512, 256, 128) if t <= max_tile]
    if not candidates:
        candidates = [_round_up(min(max_tile, b8), SUBLANE)]
    best_tb, best_cost = None, None
    for tb in candidates:
        b_pad = _round_up(B, tb)
        cost = (b_pad // tb) * 1.0 + (b_pad - B) * 0.002
        if best_cost is None or cost < best_cost:
            best_tb, best_cost = tb, cost
    return best_tb


def _vmem_limit_bytes(tb, input_dim, latent_dim):
    """Explicit VMEM budget (review item): tiled streams are double-buffered,
    weights are resident; clamp so we never ask for more than v7x can give."""
    f32 = 4
    stream_lanes = input_dim + latent_dim + input_dim + 3 * latent_dim
    tiled = 2 * tb * stream_lanes * f32                       # 2x buffered I/O
    wsize = (input_dim * 128 + 128 + 128 * 64 + 64
             + 64 * 2 * latent_dim + 2 * latent_dim
             + latent_dim * 64 + 64 + 64 * 128 + 128
             + 128 * input_dim + input_dim)
    resident = 2 * wsize * f32                                # resident params
    inter = tb * (128 + 64 + 2 * latent_dim + 3 * latent_dim
                  + 64 + 128 + input_dim) * f32               # live activations
    est = tiled + resident + inter
    return int(min(max(4 * est, 32 * 2 ** 20), 48 * 2 ** 20))


# ----------------------------------------------------------------------------
# Forward wrapper
# ----------------------------------------------------------------------------
@functools.partial(jax.jit, static_argnames=("batch_tile",))
def vae_forward(x, eps, fparams, batch_tile=1024):
    """Full VAE forward in one Pallas kernel, gridded over the batch.

    x:   (B, input_dim) float32
    eps: (B, latent_dim) float32 -- randn sample for reparameterization
    fparams: output of prepare_fused_params()
    Returns (recon, mu, logvar, z) matching the PyTorch module's forward().
    """
    B, input_dim = x.shape
    latent_dim = eps.shape[1]

    tb = _choose_batch_tile(B, batch_tile)
    b_pad = _round_up(B, tb)
    if b_pad != B:
        # Only the batch dim is ever padded (cheap); feature dims stay true.
        x = jnp.pad(x, ((0, b_pad - B), (0, 0)))
        eps = jnp.pad(eps, ((0, b_pad - B), (0, 0)))

    weights = (
        fparams["fc1_w"], fparams["fc1_b"],
        fparams["fc2_w"], fparams["fc2_b"],
        fparams["fc3_w"], fparams["fc3_b"],
        fparams["fc4_w"], fparams["fc4_b"],
        fparams["fc5_w"], fparams["fc5_b"],
        fparams["fc6_w"], fparams["fc6_b"],
    )

    # Batch-tiled specs for activations/outputs; weights stay VMEM-resident
    # across grid steps via a constant index_map.
    def tiled(nlanes):
        return pl.BlockSpec((tb, nlanes), lambda i: (i, 0))

    def resident(a):
        return pl.BlockSpec(a.shape, lambda i: (0, 0))

    in_specs = [tiled(input_dim), tiled(latent_dim)] + \
        [resident(w) for w in weights]
    out_specs = [tiled(input_dim), tiled(latent_dim),
                 tiled(latent_dim), tiled(latent_dim)]
    out_shapes = (
        jax.ShapeDtypeStruct((b_pad, input_dim), jnp.float32),   # recon
        jax.ShapeDtypeStruct((b_pad, latent_dim), jnp.float32),  # mu
        jax.ShapeDtypeStruct((b_pad, latent_dim), jnp.float32),  # logvar
        jax.ShapeDtypeStruct((b_pad, latent_dim), jnp.float32),  # z
    )

    kernel = functools.partial(_vae_kernel, latent_dim=latent_dim)

    recon_p, mu_p, logvar_p, z_p = pl.pallas_call(
        kernel,
        out_shape=out_shapes,
        grid_spec=pltpu.PrefetchScalarGridSpec(
            num_scalar_prefetch=0,
            grid=(b_pad // tb,),
            in_specs=in_specs,
            out_specs=out_specs,
        ),
        compiler_params=pltpu.CompilerParams(
            dimension_semantics=("parallel",),   # batch shards across TCs (v7x)
            vmem_limit_bytes=_vmem_limit_bytes(tb, input_dim, latent_dim),
        ),
    )(x, eps, *weights)

    return recon_p[:B], mu_p[:B], logvar_p[:B], z_p[:B]


# ----------------------------------------------------------------------------
# Pure-JAX reference (mirrors the PyTorch module, including the logvar clamp)
# ----------------------------------------------------------------------------
def vae_forward_ref(x, eps, params):
    relu = lambda a: jnp.maximum(a, 0.0)
    h1 = relu(x @ params["fc1_w"] + params["fc1_b"])
    h2 = relu(h1 @ params["fc2_w"] + params["fc2_b"])
    mu = h2 @ params["fc31_w"] + params["fc31_b"]
    logvar = jnp.clip(h2 @ params["fc32_w"] + params["fc32_b"], -5.0, 5.0)
    z = mu + eps * jnp.exp(0.5 * logvar)
    h4 = relu(z @ params["fc4_w"] + params["fc4_b"])
    h5 = relu(h4 @ params["fc5_w"] + params["fc5_b"])
    recon = h5 @ params["fc6_w"] + params["fc6_b"]
    return recon, mu, logvar, z


if __name__ == "__main__":
    INPUT_DIM = 32
    LATENT_DIM = 5
    BATCH = 24   # not a tile multiple -> exercises multi-step grid + batch pad

    key = jax.random.PRNGKey(0)
    k_params, k_x, k_eps = jax.random.split(key, 3)

    params = make_params(k_params, INPUT_DIM, LATENT_DIM)
    fparams = prepare_fused_params(params)

    x = jax.random.normal(k_x, (BATCH, INPUT_DIM), jnp.float32)
    # TODO(synk): torch.randn_like uses torch's internal RNG stream; eps is
    # generated deterministically with jax.random here and fed into the kernel.
    eps = jax.random.normal(k_eps, (BATCH, LATENT_DIM), jnp.float32)

    recon, mu, logvar, z = vae_forward(x, eps, fparams)
    jax.block_until_ready((recon, mu, logvar, z))

    r_ref, mu_ref, lv_ref, z_ref = vae_forward_ref(x, eps, params)
    assert recon.shape == (BATCH, INPUT_DIM)
    assert mu.shape == (BATCH, LATENT_DIM)
    assert logvar.shape == (BATCH, LATENT_DIM)
    assert z.shape == (BATCH, LATENT_DIM)
    assert jnp.allclose(recon, r_ref, atol=1e-4, rtol=1e-4)
    assert jnp.allclose(mu, mu_ref, atol=1e-4, rtol=1e-4)
    assert jnp.allclose(logvar, lv_ref, atol=1e-4, rtol=1e-4)
    assert jnp.allclose(z, z_ref, atol=1e-4, rtol=1e-4)

    print("KERNEL_OK")
</pallas_src>

<mosaic_0001>
module attributes {stable_mosaic.version = 11 : i64} {
  func.func @_vae_kernel(%arg0: i32, %arg1: memref<16x32xf32, #tpu.memory_space<vmem>>, %arg2: memref<16x5xf32, #tpu.memory_space<vmem>>, %arg3: memref<32x128xf32, #tpu.memory_space<vmem>>, %arg4: memref<1x128xf32, #tpu.memory_space<vmem>>, %arg5: memref<128x64xf32, #tpu.memory_space<vmem>>, %arg6: memref<1x64xf32, #tpu.memory_space<vmem>>, %arg7: memref<64x10xf32, #tpu.memory_space<vmem>>, %arg8: memref<1x10xf32, #tpu.memory_space<vmem>>, %arg9: memref<5x64xf32, #tpu.memory_space<vmem>>, %arg10: memref<1x64xf32, #tpu.memory_space<vmem>>, %arg11: memref<64x128xf32, #tpu.memory_space<vmem>>, %arg12: memref<1x128xf32, #tpu.memory_space<vmem>>, %arg13: memref<128x32xf32, #tpu.memory_space<vmem>>, %arg14: memref<1x32xf32, #tpu.memory_space<vmem>>, %arg15: memref<16x32xf32, #tpu.memory_space<vmem>>, %arg16: memref<16x5xf32, #tpu.memory_space<vmem>>, %arg17: memref<16x5xf32, #tpu.memory_space<vmem>>, %arg18: memref<16x5xf32, #tpu.memory_space<vmem>>) attributes {dimension_semantics = [#tpu.dimension_semantics<parallel>], iteration_bounds = array<i64: 2>, scalar_prefetch = 0 : i64, scratch_operands = 0 : i64, tpu.core_type = #tpu.core_type<tc>, window_params = [{transform_indices = @transform_0, window_bounds = array<i64: 16, 32>}, {transform_indices = @transform_1, window_bounds = array<i64: 16, 5>}, {pipeline_mode = #tpu.pipeline_mode<synchronous>, transform_indices = @transform_2, window_bounds = array<i64: 32, 128>}, {pipeline_mode = #tpu.pipeline_mode<synchronous>, transform_indices = @transform_3, window_bounds = array<i64: 1, 128>}, {pipeline_mode = #tpu.pipeline_mode<synchronous>, transform_indices = @transform_4, window_bounds = array<i64: 128, 64>}, {pipeline_mode = #tpu.pipeline_mode<synchronous>, transform_indices = @transform_5, window_bounds = array<i64: 1, 64>}, {pipeline_mode = #tpu.pipeline_mode<synchronous>, transform_indices = @transform_6, window_bounds = array<i64: 64, 10>}, {pipeline_mode = #tpu.pipeline_mode<synchronous>, transform_indices = @transform_7, window_bounds = array<i64: 1, 10>}, {pipeline_mode = #tpu.pipeline_mode<synchronous>, transform_indices = @transform_8, window_bounds = array<i64: 5, 64>}, {pipeline_mode = #tpu.pipeline_mode<synchronous>, transform_indices = @transform_9, window_bounds = array<i64: 1, 64>}, {pipeline_mode = #tpu.pipeline_mode<synchronous>, transform_indices = @transform_10, window_bounds = array<i64: 64, 128>}, {pipeline_mode = #tpu.pipeline_mode<synchronous>, transform_indices = @transform_11, window_bounds = array<i64: 1, 128>}, {pipeline_mode = #tpu.pipeline_mode<synchronous>, transform_indices = @transform_12, window_bounds = array<i64: 128, 32>}, {pipeline_mode = #tpu.pipeline_mode<synchronous>, transform_indices = @transform_13, window_bounds = array<i64: 1, 32>}, {transform_indices = @transform_14, window_bounds = array<i64: 16, 32>}, {transform_indices = @transform_15, window_bounds = array<i64: 16, 5>}, {transform_indices = @transform_16, window_bounds = array<i64: 16, 5>}, {transform_indices = @transform_17, window_bounds = array<i64: 16, 5>}]} {
    %c0 = arith.constant 0 : index
    %c0_0 = arith.constant 0 : index
    %0 = vector.load %arg1[%c0, %c0_0] : memref<16x32xf32, #tpu.memory_space<vmem>>, vector<16x32xf32>
    %c0_1 = arith.constant 0 : index
    %c0_2 = arith.constant 0 : index
    %1 = vector.load %arg3[%c0_1, %c0_2] : memref<32x128xf32, #tpu.memory_space<vmem>>, vector<32x128xf32>
    %cst = arith.constant dense<0.000000e+00> : vector<16x128xf32>
    %2 = tpu.matmul %0, %1, %cst {dimension_numbers = #tpu.dot_dimension_numbers<[1], [0], [0], [1], [0, 0, 1, 1], [], []>} : vector<16x32xf32>, vector<32x128xf32>, vector<16x128xf32> -> vector<16x128xf32>
    %c0_3 = arith.constant 0 : index
    %c0_4 = arith.constant 0 : index
    %3 = vector.load %arg4[%c0_3, %c0_4] : memref<1x128xf32, #tpu.memory_space<vmem>>, vector<1x128xf32>
    %4 = vector.broadcast %3 : vector<1x128xf32> to vector<16x128xf32>
    %5 = arith.addf %2, %4 : vector<16x128xf32>
    %cst_5 = arith.constant 0.000000e+00 : f32
    %6 = vector.broadcast %cst_5 : f32 to vector<16x128xf32>
    %7 = arith.maximumf %5, %6 : vector<16x128xf32>
    %c0_6 = arith.constant 0 : index
    %c0_7 = arith.constant 0 : index
    %8 = vector.load %arg5[%c0_6, %c0_7] : memref<128x64xf32, #tpu.memory_space<vmem>>, vector<128x64xf32>
    %cst_8 = arith.constant dense<0.000000e+00> : vector<16x64xf32>
    %9 = tpu.matmul %7, %8, %cst_8 {dimension_numbers = #tpu.dot_dimension_numbers<[1], [0], [0], [1], [0, 0, 1, 1], [], []>} : vector<16x128xf32>, vector<128x64xf32>, vector<16x64xf32> -> vector<16x64xf32>
    %c0_9 = arith.constant 0 : index
    %c0_10 = arith.constant 0 : index
    %10 = vector.load %arg6[%c0_9, %c0_10] : memref<1x64xf32, #tpu.memory_space<vmem>>, vector<1x64xf32>
    %11 = vector.broadcast %10 : vector<1x64xf32> to vector<16x64xf32>
    %12 = arith.addf %9, %11 : vector<16x64xf32>
    %cst_11 = arith.constant 0.000000e+00 : f32
    %13 = vector.broadcast %cst_11 : f32 to vector<16x64xf32>
    %14 = arith.maximumf %12, %13 : vector<16x64xf32>
    %c0_12 = arith.constant 0 : index
    %c0_13 = arith.constant 0 : index
    %15 = vector.load %arg7[%c0_12, %c0_13] : memref<64x10xf32, #tpu.memory_space<vmem>>, vector<64x10xf32>
    %cst_14 = arith.constant dense<0.000000e+00> : vector<16x10xf32>
    %16 = tpu.matmul %14, %15, %cst_14 {dimension_numbers = #tpu.dot_dimension_numbers<[1], [0], [0], [1], [0, 0, 1, 1], [], []>} : vector<16x64xf32>, vector<64x10xf32>, vector<16x10xf32> -> vector<16x10xf32>
    %c0_15 = arith.constant 0 : index
    %c0_16 = arith.constant 0 : index
    %17 = vector.load %arg8[%c0_15, %c0_16] : memref<1x10xf32, #tpu.memory_space<vmem>>, vector<1x10xf32>
    %18 = vector.broadcast %17 : vector<1x10xf32> to vector<16x10xf32>
    %19 = arith.addf %16, %18 : vector<16x10xf32>
    %20 = vector.extract_strided_slice %19 {offsets = [0, 0], sizes = [16, 5], strides = [1, 1]} : vector<16x10xf32> to vector<16x5xf32>
    %21 = vector.extract_strided_slice %19 {offsets = [0, 5], sizes = [16, 5], strides = [1, 1]} : vector<16x10xf32> to vector<16x5xf32>
    %cst_17 = arith.constant -5.000000e+00 : f32
    %cst_18 = arith.constant 5.000000e+00 : f32
    %22 = vector.broadcast %cst_17 : f32 to vector<16x5xf32>
    %23 = arith.maximumf %22, %21 : vector<16x5xf32>
    %24 = vector.broadcast %cst_18 : f32 to vector<16x5xf32>
    %25 = arith.minimumf %24, %23 : vector<16x5xf32>
    %cst_19 = arith.constant 5.000000e-01 : f32
    %26 = vector.broadcast %cst_19 : f32 to vector<16x5xf32>
    %27 = arith.mulf %26, %25 : vector<16x5xf32>
    %28 = math.exp %27 : vector<16x5xf32>
    %c0_20 = arith.constant 0 : index
    %c0_21 = arith.constant 0 : index
    %29 = vector.load %arg2[%c0_20, %c0_21] : memref<16x5xf32, #tpu.memory_space<vmem>>, vector<16x5xf32>
    %30 = arith.mulf %29, %28 : vector<16x5xf32>
    %31 = arith.addf %20, %30 : vector<16x5xf32>
    %c0_22 = arith.constant 0 : index
    %c0_23 = arith.constant 0 : index
    %32 = vector.load %arg9[%c0_22, %c0_23] : memref<5x64xf32, #tpu.memory_space<vmem>>, vector<5x64xf32>
    %cst_24 = arith.constant dense<0.000000e+00> : vector<16x64xf32>
    %33 = tpu.matmul %31, %32, %cst_24 {dimension_numbers = #tpu.dot_dimension_numbers<[1], [0], [0], [1], [0, 0, 1, 1], [], []>} : vector<16x5xf32>, vector<5x64xf32>, vector<16x64xf32> -> vector<16x64xf32>
    %c0_25 = arith.constant 0 : index
    %c0_26 = arith.constant 0 : index
    %34 = vector.load %arg10[%c0_25, %c0_26] : memref<1x64xf32, #tpu.memory_space<vmem>>, vector<1x64xf32>
    %35 = vector.broadcast %34 : vector<1x64xf32> to vector<16x64xf32>
    %36 = arith.addf %33, %35 : vector<16x64xf32>
    %cst_27 = arith.constant 0.000000e+00 : f32
    %37 = vector.broadcast %cst_27 : f32 to vector<16x64xf32>
    %38 = arith.maximumf %36, %37 : vector<16x64xf32>
    %c0_28 = arith.constant 0 : index
    %c0_29 = arith.constant 0 : index
    %39 = vector.load %arg11[%c0_28, %c0_29] : memref<64x128xf32, #tpu.memory_space<vmem>>, vector<64x128xf32>
    %cst_30 = arith.constant dense<0.000000e+00> : vector<16x128xf32>
    %40 = tpu.matmul %38, %39, %cst_30 {dimension_numbers = #tpu.dot_dimension_numbers<[1], [0], [0], [1], [0, 0, 1, 1], [], []>} : vector<16x64xf32>, vector<64x128xf32>, vector<16x128xf32> -> vector<16x128xf32>
    %c0_31 = arith.constant 0 : index
    %c0_32 = arith.constant 0 : index
    %41 = vector.load %arg12[%c0_31, %c0_32] : memref<1x128xf32, #tpu.memory_space<vmem>>, vector<1x128xf32>
    %42 = vector.broadcast %41 : vector<1x128xf32> to vector<16x128xf32>
    %43 = arith.addf %40, %42 : vector<16x128xf32>
    %cst_33 = arith.constant 0.000000e+00 : f32
    %44 = vector.broadcast %cst_33 : f32 to vector<16x128xf32>
    %45 = arith.maximumf %43, %44 : vector<16x128xf32>
    %c0_34 = arith.constant 0 : index
    %c0_35 = arith.constant 0 : index
    %46 = vector.load %arg13[%c0_34, %c0_35] : memref<128x32xf32, #tpu.memory_space<vmem>>, vector<128x32xf32>
    %cst_36 = arith.constant dense<0.000000e+00> : vector<16x32xf32>
    %47 = tpu.matmul %45, %46, %cst_36 {dimension_numbers = #tpu.dot_dimension_numbers<[1], [0], [0], [1], [0, 0, 1, 1], [], []>} : vector<16x128xf32>, vector<128x32xf32>, vector<16x32xf32> -> vector<16x32xf32>
    %c0_37 = arith.constant 0 : index
    %c0_38 = arith.constant 0 : index
    %48 = vector.load %arg14[%c0_37, %c0_38] : memref<1x32xf32, #tpu.memory_space<vmem>>, vector<1x32xf32>
    %49 = vector.broadcast %48 : vector<1x32xf32> to vector<16x32xf32>
    %50 = arith.addf %47, %49 : vector<16x32xf32>
    %c0_39 = arith.constant 0 : index
    %c0_40 = arith.constant 0 : index
    %51 = vector.load %arg15[%c0_39, %c0_40] : memref<16x32xf32, #tpu.memory_space<vmem>>, vector<16x32xf32>
    tpu.vector_store %arg15[%c0_39, %c0_40], %50 {strides = array<i32>} : memref<16x32xf32, #tpu.memory_space<vmem>>, vector<16x32xf32>,
    %c0_41 = arith.constant 0 : index
    %c0_42 = arith.constant 0 : index
    %52 = vector.load %arg16[%c0_41, %c0_42] : memref<16x5xf32, #tpu.memory_space<vmem>>, vector<16x5xf32>
    tpu.vector_store %arg16[%c0_41, %c0_42], %20 {strides = array<i32>} : memref<16x5xf32, #tpu.memory_space<vmem>>, vector<16x5xf32>,
    %c0_43 = arith.constant 0 : index
    %c0_44 = arith.constant 0 : index
    %53 = vector.load %arg17[%c0_43, %c0_44] : memref<16x5xf32, #tpu.memory_space<vmem>>, vector<16x5xf32>
    tpu.vector_store %arg17[%c0_43, %c0_44], %25 {strides = array<i32>} : memref<16x5xf32, #tpu.memory_space<vmem>>, vector<16x5xf32>,
    %c0_45 = arith.constant 0 : index
    %c0_46 = arith.constant 0 : index
    %54 = vector.load %arg18[%c0_45, %c0_46] : memref<16x5xf32, #tpu.memory_space<vmem>>, vector<16x5xf32>
    tpu.vector_store %arg18[%c0_45, %c0_46], %31 {strides = array<i32>} : memref<16x5xf32, #tpu.memory_space<vmem>>, vector<16x5xf32>,
    return
  }
  func.func @transform_0(%arg0: i32) -> (i32, i32) {
    %c0_i32 = arith.constant 0 : i32
    %c0_i32_0 = arith.constant 0 : i32
    return %arg0, %c0_i32 : i32, i32
  }
  func.func @transform_1(%arg0: i32) -> (i32, i32) {
    %c0_i32 = arith.constant 0 : i32
    %c0_i32_0 = arith.constant 0 : i32
    return %arg0, %c0_i32 : i32, i32
  }
  func.func @transform_2(%arg0: i32) -> (i32, i32) {
    %c0_i32 = arith.constant 0 : i32
    %c0_i32_0 = arith.constant 0 : i32
    %c0_i32_1 = arith.constant 0 : i32
    return %c0_i32, %c0_i32_0 : i32, i32
  }
  func.func @transform_3(%arg0: i32) -> (i32, i32) {
    %c0_i32 = arith.constant 0 : i32
    %c0_i32_0 = arith.constant 0 : i32
    %c0_i32_1 = arith.constant 0 : i32
    return %c0_i32, %c0_i32_0 : i32, i32
  }
  func.func @transform_4(%arg0: i32) -> (i32, i32) {
    %c0_i32 = arith.constant 0 : i32
    %c0_i32_0 = arith.constant 0 : i32
    %c0_i32_1 = arith.constant 0 : i32
    return %c0_i32, %c0_i32_0 : i32, i32
  }
  func.func @transform_5(%arg0: i32) -> (i32, i32) {
    %c0_i32 = arith.constant 0 : i32
    %c0_i32_0 = arith.constant 0 : i32
    %c0_i32_1 = arith.constant 0 : i32
    return %c0_i32, %c0_i32_0 : i32, i32
  }
  func.func @transform_6(%arg0: i32) -> (i32, i32) {
    %c0_i32 = arith.constant 0 : i32
    %c0_i32_0 = arith.constant 0 : i32
    %c0_i32_1 = arith.constant 0 : i32
    return %c0_i32, %c0_i32_0 : i32, i32
  }
  func.func @transform_7(%arg0: i32) -> (i32, i32) {
    %c0_i32 = arith.constant 0 : i32
    %c0_i32_0 = arith.constant 0 : i32
    %c0_i32_1 = arith.constant 0 : i32
    return %c0_i32, %c0_i32_0 : i32, i32
  }
  func.func @transform_8(%arg0: i32) -> (i32, i32) {
    %c0_i32 = arith.constant 0 : i32
    %c0_i32_0 = arith.constant 0 : i32
    %c0_i32_1 = arith.constant 0 : i32
    return %c0_i32, %c0_i32_0 : i32, i32
  }
  func.func @transform_9(%arg0: i32) -> (i32, i32) {
    %c0_i32 = arith.constant 0 : i32
    %c0_i32_0 = arith.constant 0 : i32
    %c0_i32_1 = arith.constant 0 : i32
    return %c0_i32, %c0_i32_0 : i32, i32
  }
  func.func @transform_10(%arg0: i32) -> (i32, i32) {
    %c0_i32 = arith.constant 0 : i32
    %c0_i32_0 = arith.constant 0 : i32
    %c0_i32_1 = arith.constant 0 : i32
    return %c0_i32, %c0_i32_0 : i32, i32
  }
  func.func @transform_11(%arg0: i32) -> (i32, i32) {
    %c0_i32 = arith.constant 0 : i32
    %c0_i32_0 = arith.constant 0 : i32
    %c0_i32_1 = arith.constant 0 : i32
    return %c0_i32, %c0_i32_0 : i32, i32
  }
  func.func @transform_12(%arg0: i32) -> (i32, i32) {
    %c0_i32 = arith.constant 0 : i32
    %c0_i32_0 = arith.constant 0 : i32
    %c0_i32_1 = arith.constant 0 : i32
    return %c0_i32, %c0_i32_0 : i32, i32
  }
  func.func @transform_13(%arg0: i32) -> (i32, i32) {
    %c0_i32 = arith.constant 0 : i32
    %c0_i32_0 = arith.constant 0 : i32
    %c0_i32_1 = arith.constant 0 : i32
    return %c0_i32, %c0_i32_0 : i32, i32
  }
  func.func @transform_14(%arg0: i32) -> (i32, i32) {
    %c0_i32 = arith.constant 0 : i32
    %c0_i32_0 = arith.constant 0 : i32
    return %arg0, %c0_i32 : i32, i32
  }
  func.func @transform_15(%arg0: i32) -> (i32, i32) {
    %c0_i32 = arith.constant 0 : i32
    %c0_i32_0 = arith.constant 0 : i32
    return %arg0, %c0_i32 : i32, i32
  }
  func.func @transform_16(%arg0: i32) -> (i32, i32) {
    %c0_i32 = arith.constant 0 : i32
    %c0_i32_0 = arith.constant 0 : i32
    return %arg0, %c0_i32 : i32, i32
  }
  func.func @transform_17(%arg0: i32) -> (i32, i32) {
    %c0_i32 = arith.constant 0 : i32
    %c0_i32_0 = arith.constant 0 : i32
    return %arg0, %c0_i32 : i32, i32
  }
}

</mosaic_0001>

<llo_original>
// kernel: vae_forward.1
$region0: #{vae_forward.1}
  #allocation0 [shape = 'u32[]', space=smem, size = 0x4, offset = 0x4, fixed_abs, tag = 'smem constant byte address 0x4 - core index']
  #allocation1 [shape = 'u32[72,128]{1,0:T(1,128)}', space=vmem, size = 0x9000, scoped, tag = 'internal scratch']
  %s0 = inlined_call_operand.vmem [shape: f32[32,32], index: 0, kind: input, shape index: {}]
  %s1 = inlined_call_operand.vmem [shape: f32[32,5], index: 1, kind: input, shape index: {}]
  %s2 = inlined_call_operand.vmem [shape: f32[32,128], index: 2, kind: input, shape index: {}]
  %s3 = inlined_call_operand.vmem [shape: f32[1,128], index: 3, kind: input, shape index: {}]
  %s4 = inlined_call_operand.vmem [shape: f32[128,64], index: 4, kind: input, shape index: {}]
  %s5 = inlined_call_operand.vmem [shape: f32[1,64], index: 5, kind: input, shape index: {}]
  %s6 = inlined_call_operand.vmem [shape: f32[64,10], index: 6, kind: input, shape index: {}]
  %s7 = inlined_call_operand.vmem [shape: f32[1,10], index: 7, kind: input, shape index: {}]
  %s8 = inlined_call_operand.vmem [shape: f32[5,64], index: 8, kind: input, shape index: {}]
  %s9 = inlined_call_operand.vmem [shape: f32[1,64], index: 9, kind: input, shape index: {}]
  %s10 = inlined_call_operand.vmem [shape: f32[64,128], index: 10, kind: input, shape index: {}]
  %s11 = inlined_call_operand.vmem [shape: f32[1,128], index: 11, kind: input, shape index: {}]
  %s12 = inlined_call_operand.vmem [shape: f32[128,32], index: 12, kind: input, shape index: {}]
  %s13 = inlined_call_operand.vmem [shape: f32[1,32], index: 13, kind: input, shape index: {}]
  %s14 = inlined_call_operand.vmem [shape: f32[32,32], index: 14, kind: output, shape index: {0}]
  %s15 = inlined_call_operand.vmem [shape: f32[32,5], index: 15, kind: output, shape index: {1}]
  %s16 = inlined_call_operand.vmem [shape: f32[32,5], index: 16, kind: output, shape index: {2}]
  %s17 = inlined_call_operand.vmem [shape: f32[32,5], index: 17, kind: output, shape index: {3}]
  %18 = xla_tuple %s14, %s15, %s16, %s17
  %s19 = sld [smem:[#allocation0]]
  $region113: #{vae_forward.1} parent=0
    _
  %s21 = ssub.s32 1, %s19
  %s22 = scalar_select 0, %s21, %s19
  loop: start=0, step=1, limit=4
  $region2: #{vae_forward.1} parent=0 // loop_pre_header
    _
  $region3: #{vae_forward.1} parent=0 // loop_header
    %s24 = sphi 0, %s28
    %p25 = scmp.ge.s32.totalorder %s24, 4
    %s34 = sphi 0, %s36
    %s37 = sphi 0, %s34
    %s38 = sphi 0, %s37
    %s54 = sphi 0, %s38
    %s60 = sphi 0, %s62
    %s63 = sphi 0, %s60
    %s64 = sphi 0, %s63
    %s80 = sphi 0, %s64
    %s84 = sphi 0, %s84
    %s86 = sphi 0, %s84
    %s87 = sphi 0, %s86
    %s101 = sphi 0, %s87
    %s105 = sphi 0, %s105
    %s107 = sphi 0, %s105
    %s108 = sphi 0, %s107
    %s122 = sphi 0, %s108
    %s126 = sphi 0, %s126
    %s128 = sphi 0, %s126
    %s129 = sphi 0, %s128
    %s143 = sphi 0, %s129
    %s147 = sphi 0, %s147
    %s149 = sphi 0, %s147
    %s150 = sphi 0, %s149
    %s164 = sphi 0, %s150
    %s168 = sphi 0, %s168
    %s170 = sphi 0, %s168
    %s171 = sphi 0, %s170
    %s185 = sphi 0, %s171
    %s189 = sphi 0, %s189
    %s191 = sphi 0, %s189
    %s192 = sphi 0, %s191
    %s206 = sphi 0, %s192
    %s210 = sphi 0, %s210
    %s212 = sphi 0, %s210
    %s213 = sphi 0, %s212
    %s227 = sphi 0, %s213
    %s231 = sphi 0, %s231
    %s233 = sphi 0, %s231
    %s234 = sphi 0, %s233
    %s248 = sphi 0, %s234
    %s252 = sphi 0, %s252
    %s254 = sphi 0, %s252
    %s255 = sphi 0, %s254
    %s269 = sphi 0, %s255
    %s273 = sphi 0, %s273
    %s275 = sphi 0, %s273
    %s276 = sphi 0, %s275
    %s290 = sphi 0, %s276
    %s294 = sphi 0, %s294
    %s296 = sphi 0, %s294
    %s297 = sphi 0, %s296
    %s311 = sphi 0, %s297
    %s315 = sphi 0, %s315
    %s317 = sphi 0, %s315
    %s318 = sphi 0, %s317
    %s332 = sphi 0, %s318
    %s338 = sphi 0, %s340
    %s341 = sphi 0, %s338
    %s342 = sphi 0, %s341
    %s358 = sphi 0, %s342
    %s364 = sphi 0, %s366
    %s367 = sphi 0, %s364
    %s368 = sphi 0, %s367
    %s384 = sphi 0, %s368
    %s390 = sphi 0, %s392
    %s393 = sphi 0, %s390
    %s394 = sphi 0, %s393
    %s410 = sphi 0, %s394
    %s416 = sphi 0, %s418
    %s419 = sphi 0, %s416
    %s420 = sphi 0, %s419
    %s436 = sphi 0, %s420
  $region4: #{vae_forward.1} parent=0 // loop_header_branch
    %27 = sbr.rel (%p25) target = $region8
  $region5: #{vae_forward.1} parent=0 // loop_body
    %s29 = ssub.s32 %s24, 1
    %s30 = ssub.s32 %s24, 2
    %s31 = sadd.s32 %s24, 1
    %s32 = ssub.s32 %s24, %s31
    %p33 = scmp.eq.s32.totalorder %s32, 0
    %s35 = sadd.s32 %s34, 1
    %s36 = scalar_select %p33, %s34, %s35
    %p39 = pneg %p33
    %p40 = scmp.eq.s32.totalorder %s24, 1
    %p41 = por %p39, %p40
    %p42 = scmp.ne.s32.totalorder %s34, %s37
    %p43 = scmp.eq.s32.totalorder %s24, 0
    %p44 = por %p42, %p43
    %p45 = scmp.ne.s32.totalorder %s34, %s37
    %p46 = scmp.eq.s32.totalorder %s29, 1
    %p47 = por %p45, %p46
    %p48 = scmp.ne.s32.totalorder %s37, %s38
    %p49 = scmp.eq.s32.totalorder %s29, 0
    %p50 = por %p48, %p49
    %p51 = scmp.ne.s32.totalorder %s37, %s38
    %p52 = scmp.eq.s32.totalorder %s30, 1
    %p53 = por %p51, %p52
    %p55 = scmp.ne.s32.totalorder %s38, %s54
    %p56 = scmp.eq.s32.totalorder %s30, 0
    %p57 = por %p55, %p56
    %s58 = ssub.s32 %s24, %s31
    %p59 = scmp.eq.s32.totalorder %s58, 0
    %s61 = sadd.s32 %s60, 1
    %s62 = scalar_select %p59, %s60, %s61
    %p65 = pneg %p59
    %p66 = scmp.eq.s32.totalorder %s24, 1
    %p67 = por %p65, %p66
    %p68 = scmp.ne.s32.totalorder %s60, %s63
    %p69 = scmp.eq.s32.totalorder %s24, 0
    %p70 = por %p68, %p69
    %p71 = scmp.ne.s32.totalorder %s60, %s63
    %p72 = scmp.eq.s32.totalorder %s29, 1
    %p73 = por %p71, %p72
    %p74 = scmp.ne.s32.totalorder %s63, %s64
    %p75 = scmp.eq.s32.totalorder %s29, 0
    %p76 = por %p74, %p75
    %p77 = scmp.ne.s32.totalorder %s63, %s64
    %p78 = scmp.eq.s32.totalorder %s30, 1
    %p79 = por %p77, %p78
    %p81 = scmp.ne.s32.totalorder %s64, %s80
    %p82 = scmp.eq.s32.totalorder %s30, 0
    %p83 = por %p81, %p82
    %s85 = sadd.s32 %s84, 1
    %p88 = scmp.eq.s32.totalorder %s24, 1
    %p89 = scmp.ne.s32.totalorder %s84, %s86
    %p90 = scmp.eq.s32.totalorder %s24, 0
    %p91 = por %p89, %p90
    %p92 = scmp.ne.s32.totalorder %s84, %s86
    %p93 = scmp.eq.s32.totalorder %s29, 1
    %p94 = por %p92, %p93
    %p95 = scmp.ne.s32.totalorder %s86, %s87
    %p96 = scmp.eq.s32.totalorder %s29, 0
    %p97 = por %p95, %p96
    %p98 = scmp.ne.s32.totalorder %s86, %s87
    %p99 = scmp.eq.s32.totalorder %s30, 1
    %p100 = por %p98, %p99
    %p102 = scmp.ne.s32.totalorder %s87, %s101
    %p103 = scmp.eq.s32.totalorder %s30, 0
    %p104 = por %p102, %p103
    %s106 = sadd.s32 %s105, 1
    %p109 = scmp.eq.s32.totalorder %s24, 1
    %p110 = scmp.ne.s32.totalorder %s105, %s107
    %p111 = scmp.eq.s32.totalorder %s24, 0
    %p112 = por %p110, %p111
    %p113 = scmp.ne.s32.totalorder %s105, %s107
    %p114 = scmp.eq.s32.totalorder %s29, 1
    %p115 = por %p113, %p114
    %p116 = scmp.ne.s32.totalorder %s107, %s108
    %p117 = scmp.eq.s32.totalorder %s29, 0
    %p118 = por %p116, %p117
    %p119 = scmp.ne.s32.totalorder %s107, %s108
    %p120 = scmp.eq.s32.totalorder %s30, 1
    %p121 = por %p119, %p120
    %p123 = scmp.ne.s32.totalorder %s108, %s122
    %p124 = scmp.eq.s32.totalorder %s30, 0
    %p125 = por %p123, %p124
    %s127 = sadd.s32 %s126, 1
    %p130 = scmp.eq.s32.totalorder %s24, 1
    %p131 = scmp.ne.s32.totalorder %s126, %s128
    %p132 = scmp.eq.s32.totalorder %s24, 0
    %p133 = por %p131, %p132
    %p134 = scmp.ne.s32.totalorder %s126, %s128
    %p135 = scmp.eq.s32.totalorder %s29, 1
    %p136 = por %p134, %p135
    %p137 = scmp.ne.s32.totalorder %s128, %s129
    %p138 = scmp.eq.s32.totalorder %s29, 0
    %p139 = por %p137, %p138
    %p140 = scmp.ne.s32.totalorder %s128, %s129
    %p141 = scmp.eq.s32.totalorder %s30, 1
    %p142 = por %p140, %p141
    %p144 = scmp.ne.s32.totalorder %s129, %s143
    %p145 = scmp.eq.s32.totalorder %s30, 0
    %p146 = por %p144, %p145
    %s148 = sadd.s32 %s147, 1
    %p151 = scmp.eq.s32.totalorder %s24, 1
    %p152 = scmp.ne.s32.totalorder %s147, %s149
    %p153 = scmp.eq.s32.totalorder %s24, 0
    %p154 = por %p152, %p153
    %p155 = scmp.ne.s32.totalorder %s147, %s149
    %p156 = scmp.eq.s32.totalorder %s29, 1
    %p157 = por %p155, %p156
    %p158 = scmp.ne.s32.totalorder %s149, %s150
    %p159 = scmp.eq.s32.totalorder %s29, 0
    %p160 = por %p158, %p159
    %p161 = scmp.ne.s32.totalorder %s149, %s150
    %p162 = scmp.eq.s32.totalorder %s30, 1
    %p163 = por %p161, %p162
    %p165 = scmp.ne.s32.totalorder %s150, %s164
    %p166 = scmp.eq.s32.totalorder %s30, 0
    %p167 = por %p165, %p166
    %s169 = sadd.s32 %s168, 1
    %p172 = scmp.eq.s32.totalorder %s24, 1
    %p173 = scmp.ne.s32.totalorder %s168, %s170
    %p174 = scmp.eq.s32.totalorder %s24, 0
    %p175 = por %p173, %p174
    %p176 = scmp.ne.s32.totalorder %s168, %s170
    %p177 = scmp.eq.s32.totalorder %s29, 1
    %p178 = por %p176, %p177
    %p179 = scmp.ne.s32.totalorder %s170, %s171
    %p180 = scmp.eq.s32.totalorder %s29, 0
    %p181 = por %p179, %p180
    %p182 = scmp.ne.s32.totalorder %s170, %s171
    %p183 = scmp.eq.s32.totalorder %s30, 1
    %p184 = por %p182, %p183
    %p186 = scmp.ne.s32.totalorder %s171, %s185
    %p187 = scmp.eq.s32.totalorder %s30, 0
    %p188 = por %p186, %p187
    %s190 = sadd.s32 %s189, 1
    %p193 = scmp.eq.s32.totalorder %s24, 1
    %p194 = scmp.ne.s32.totalorder %s189, %s191
    %p195 = scmp.eq.s32.totalorder %s24, 0
    %p196 = por %p194, %p195
    %p197 = scmp.ne.s32.totalorder %s189, %s191
    %p198 = scmp.eq.s32.totalorder %s29, 1
    %p199 = por %p197, %p198
    %p200 = scmp.ne.s32.totalorder %s191, %s192
    %p201 = scmp.eq.s32.totalorder %s29, 0
    %p202 = por %p200, %p201
    %p203 = scmp.ne.s32.totalorder %s191, %s192
    %p204 = scmp.eq.s32.totalorder %s30, 1
    %p205 = por %p203, %p204
    %p207 = scmp.ne.s32.totalorder %s192, %s206
    %p208 = scmp.eq.s32.totalorder %s30, 0
    %p209 = por %p207, %p208
    %s211 = sadd.s32 %s210, 1
    %p214 = scmp.eq.s32.totalorder %s24, 1
    %p215 = scmp.ne.s32.totalorder %s210, %s212
    %p216 = scmp.eq.s32.totalorder %s24, 0
    %p217 = por %p215, %p216
    %p218 = scmp.ne.s32.totalorder %s210, %s212
    %p219 = scmp.eq.s32.totalorder %s29, 1
    %p220 = por %p218, %p219
    %p221 = scmp.ne.s32.totalorder %s212, %s213
    %p222 = scmp.eq.s32.totalorder %s29, 0
    %p223 = por %p221, %p222
    %p224 = scmp.ne.s32.totalorder %s212, %s213
    %p225 = scmp.eq.s32.totalorder %s30, 1
    %p226 = por %p224, %p225
    %p228 = scmp.ne.s32.totalorder %s213, %s227
    %p229 = scmp.eq.s32.totalorder %s30, 0
    %p230 = por %p228, %p229
    %s232 = sadd.s32 %s231, 1
    %p235 = scmp.eq.s32.totalorder %s24, 1
    %p236 = scmp.ne.s32.totalorder %s231, %s233
    %p237 = scmp.eq.s32.totalorder %s24, 0
    %p238 = por %p236, %p237
    %p239 = scmp.ne.s32.totalorder %s231, %s233
    %p240 = scmp.eq.s32.totalorder %s29, 1
    %p241 = por %p239, %p240
    %p242 = scmp.ne.s32.totalorder %s233, %s234
    %p243 = scmp.eq.s32.totalorder %s29, 0
    %p244 = por %p242, %p243
    %p245 = scmp.ne.s32.totalorder %s233, %s234
    %p246 = scmp.eq.s32.totalorder %s30, 1
    %p247 = por %p245, %p246
    %p249 = scmp.ne.s32.totalorder %s234, %s248
    %p250 = scmp.eq.s32.totalorder %s30, 0
    %p251 = por %p249, %p250
    %s253 = sadd.s32 %s252, 1
    %p256 = scmp.eq.s32.totalorder %s24, 1
    %p257 = scmp.ne.s32.totalorder %s252, %s254
    %p258 = scmp.eq.s32.totalorder %s24, 0
    %p259 = por %p257, %p258
    %p260 = scmp.ne.s32.totalorder %s252, %s254
    %p261 = scmp.eq.s32.totalorder %s29, 1
    %p262 = por %p260, %p261
    %p263 = scmp.ne.s32.totalorder %s254, %s255
    %p264 = scmp.eq.s32.totalorder %s29, 0
    %p265 = por %p263, %p264
    %p266 = scmp.ne.s32.totalorder %s254, %s255
    %p267 = scmp.eq.s32.totalorder %s30, 1
    %p268 = por %p266, %p267
    %p270 = scmp.ne.s32.totalorder %s255, %s269
    %p271 = scmp.eq.s32.totalorder %s30, 0
    %p272 = por %p270, %p271
    %s274 = sadd.s32 %s273, 1
    %p277 = scmp.eq.s32.totalorder %s24, 1
    %p278 = scmp.ne.s32.totalorder %s273, %s275
    %p279 = scmp.eq.s32.totalorder %s24, 0
    %p280 = por %p278, %p279
    %p281 = scmp.ne.s32.totalorder %s273, %s275
    %p282 = scmp.eq.s32.totalorder %s29, 1
    %p283 = por %p281, %p282
    %p284 = scmp.ne.s32.totalorder %s275, %s276
    %p285 = scmp.eq.s32.totalorder %s29, 0
    %p286 = por %p284, %p285
    %p287 = scmp.ne.s32.totalorder %s275, %s276
    %p288 = scmp.eq.s32.totalorder %s30, 1
    %p289 = por %p287, %p288
    %p291 = scmp.ne.s32.totalorder %s276, %s290
    %p292 = scmp.eq.s32.totalorder %s30, 0
    %p293 = por %p291, %p292
    %s295 = sadd.s32 %s294, 1
    %p298 = scmp.eq.s32.totalorder %s24, 1
    %p299 = scmp.ne.s32.totalorder %s294, %s296
    %p300 = scmp.eq.s32.totalorder %s24, 0
    %p301 = por %p299, %p300
    %p302 = scmp.ne.s32.totalorder %s294, %s296
    %p303 = scmp.eq.s32.totalorder %s29, 1
    %p304 = por %p302, %p303
    %p305 = scmp.ne.s32.totalorder %s296, %s297
    %p306 = scmp.eq.s32.totalorder %s29, 0
    %p307 = por %p305, %p306
    %p308 = scmp.ne.s32.totalorder %s296, %s297
    %p309 = scmp.eq.s32.totalorder %s30, 1
    %p310 = por %p308, %p309
    %p312 = scmp.ne.s32.totalorder %s297, %s311
    %p313 = scmp.eq.s32.totalorder %s30, 0
    %p314 = por %p312, %p313
    %s316 = sadd.s32 %s315, 1
    %p319 = scmp.eq.s32.totalorder %s24, 1
    %p320 = scmp.ne.s32.totalorder %s315, %s317
    %p321 = scmp.eq.s32.totalorder %s24, 0
    %p322 = por %p320, %p321
    %p323 = scmp.ne.s32.totalorder %s315, %s317
    %p324 = scmp.eq.s32.totalorder %s29, 1
    %p325 = por %p323, %p324
    %p326 = scmp.ne.s32.totalorder %s317, %s318
    %p327 = scmp.eq.s32.totalorder %s29, 0
    %p328 = por %p326, %p327
    %p329 = scmp.ne.s32.totalorder %s317, %s318
    %p330 = scmp.eq.s32.totalorder %s30, 1
    %p331 = por %p329, %p330
    %p333 = scmp.ne.s32.totalorder %s318, %s332
    %p334 = scmp.eq.s32.totalorder %s30, 0
    %p335 = por %p333, %p334
    %s336 = ssub.s32 %s24, %s31
    %p337 = scmp.eq.s32.totalorder %s336, 0
    %s339 = sadd.s32 %s338, 1
    %s340 = scalar_select %p337, %s338, %s339
    %p343 = pneg %p337
    %p344 = scmp.eq.s32.totalorder %s24, 1
    %p345 = por %p343, %p344
    %p346 = scmp.ne.s32.totalorder %s338, %s341
    %p347 = scmp.eq.s32.totalorder %s24, 0
    %p348 = por %p346, %p347
    %p349 = scmp.ne.s32.totalorder %s338, %s341
    %p350 = scmp.eq.s32.totalorder %s29, 1
    %p351 = por %p349, %p350
    %p352 = scmp.ne.s32.totalorder %s341, %s342
    %p353 = scmp.eq.s32.totalorder %s29, 0
    %p354 = por %p352, %p353
    %p355 = scmp.ne.s32.totalorder %s341, %s342
    %p356 = scmp.eq.s32.totalorder %s30, 1
    %p357 = por %p355, %p356
    %p359 = scmp.ne.s32.totalorder %s342, %s358
    %p360 = scmp.eq.s32.totalorder %s30, 0
    %p361 = por %p359, %p360
    %s362 = ssub.s32 %s24, %s31
    %p363 = scmp.eq.s32.totalorder %s362, 0
    %s365 = sadd.s32 %s364, 1
    %s366 = scalar_select %p363, %s364, %s365
    %p369 = pneg %p363
    %p370 = scmp.eq.s32.totalorder %s24, 1
    %p371 = por %p369, %p370
    %p372 = scmp.ne.s32.totalorder %s364, %s367
    %p373 = scmp.eq.s32.totalorder %s24, 0
    %p374 = por %p372, %p373
    %p375 = scmp.ne.s32.totalorder %s364, %s367
    %p376 = scmp.eq.s32.totalorder %s29, 1
    %p377 = por %p375, %p376
    %p378 = scmp.ne.s32.totalorder %s367, %s368
    %p379 = scmp.eq.s32.totalorder %s29, 0
    %p380 = por %p378, %p379
    %p381 = scmp.ne.s32.totalorder %s367, %s368
    %p382 = scmp.eq.s32.totalorder %s30, 1
    %p383 = por %p381, %p382
    %p385 = scmp.ne.s32.totalorder %s368, %s384
    %p386 = scmp.eq.s32.totalorder %s30, 0
    %p387 = por %p385, %p386
    %s388 = ssub.s32 %s24, %s31
    %p389 = scmp.eq.s32.totalorder %s388, 0
    %s391 = sadd.s32 %s390, 1
    %s392 = scalar_select %p389, %s390, %s391
    %p395 = pneg %p389
    %p396 = scmp.eq.s32.totalorder %s24, 1
    %p397 = por %p395, %p396
    %p398 = scmp.ne.s32.totalorder %s390, %s393
    %p399 = scmp.eq.s32.totalorder %s24, 0
    %p400 = por %p398, %p399
    %p401 = scmp.ne.s32.totalorder %s390, %s393
    %p402 = scmp.eq.s32.totalorder %s29, 1
    %p403 = por %p401, %p402
    %p404 = scmp.ne.s32.totalorder %s393, %s394
    %p405 = scmp.eq.s32.totalorder %s29, 0
    %p406 = por %p404, %p405
    %p407 = scmp.ne.s32.totalorder %s393, %s394
    %p408 = scmp.eq.s32.totalorder %s30, 1
    %p409 = por %p407, %p408
    %p411 = scmp.ne.s32.totalorder %s394, %s410
    %p412 = scmp.eq.s32.totalorder %s30, 0
    %p413 = por %p411, %p412
    %s414 = ssub.s32 %s24, %s31
    %p415 = scmp.eq.s32.totalorder %s414, 0
    %s417 = sadd.s32 %s416, 1
    %s418 = scalar_select %p415, %s416, %s417
    %p421 = pneg %p415
    %p422 = scmp.eq.s32.totalorder %s24, 1
    %p423 = por %p421, %p422
    %p424 = scmp.ne.s32.totalorder %s416, %s419
    %p425 = scmp.eq.s32.totalorder %s24, 0
    %p426 = por %p424, %p425
    %p427 = scmp.ne.s32.totalorder %s416, %s419
    %p428 = scmp.eq.s32.totalorder %s29, 1
    %p429 = por %p427, %p428
    %p430 = scmp.ne.s32.totalorder %s419, %s420
    %p431 = scmp.eq.s32.totalorder %s29, 0
    %p432 = por %p430, %p431
    %p433 = scmp.ne.s32.totalorder %s419, %s420
    %p434 = scmp.eq.s32.totalorder %s30, 1
    %p435 = por %p433, %p434
    %p437 = scmp.ne.s32.totalorder %s420, %s436
    %p438 = scmp.eq.s32.totalorder %s30, 0
    %p439 = por %p437, %p438
    %p440 = scmp.le.s32.totalorder 1, %s24
    %p441 = scmp.lt.s32.totalorder %s24, 3
    %p442 = pnand %p440, %p441
    %p443 = pneg %p442
    // Predicated region
    $region9: #{vae_forward.1} parent=5 // pred_check
      _
    $region10: #{vae_forward.1} parent=5 // pred_check_branch
      %445 = sbr.rel (%p442) target = $region12
    $region11: #{vae_forward.1} parent=5 // pred_region
      %s446 = ssub.s32 %s24, 1
      // Predicated region
      $region13: #{vae_forward.1} parent=11 // pred_check
        %p447 = pneg %p97
      $region14: #{vae_forward.1} parent=11 // pred_check_branch
        %449 = sbr.rel (%p447) target = $region16
      $region15: #{vae_forward.1} parent=11 // pred_region
        _
      $region16: #{vae_forward.1} parent=11 // pred_fallthru
        _
      // Predicated region
      $region17: #{vae_forward.1} parent=11 // pred_check
        %p450 = pneg %p118
      $region18: #{vae_forward.1} parent=11 // pred_check_branch
        %452 = sbr.rel (%p450) target = $region20
      $region19: #{vae_forward.1} parent=11 // pred_region
        _
      $region20: #{vae_forward.1} parent=11 // pred_fallthru
        _
      // Predicated region
      $region21: #{vae_forward.1} parent=11 // pred_check
        %p453 = pneg %p139
      $region22: #{vae_forward.1} parent=11 // pred_check_branch
        %455 = sbr.rel (%p453) target = $region24
      $region23: #{vae_forward.1} parent=11 // pred_region
        _
      $region24: #{vae_forward.1} parent=11 // pred_fallthru
        _
      // Predicated region
      $region25: #{vae_forward.1} parent=11 // pred_check
        %p456 = pneg %p160
      $region26: #{vae_forward.1} parent=11 // pred_check_branch
        %458 = sbr.rel (%p456) target = $region28
      $region27: #{vae_forward.1} parent=11 // pred_region
        _
      $region28: #{vae_forward.1} parent=11 // pred_fallthru
        _
      // Predicated region
      $region29: #{vae_forward.1} parent=11 // pred_check
        %p459 = pneg %p181
      $region30: #{vae_forward.1} parent=11 // pred_check_branch
        %461 = sbr.rel (%p459) target = $region32
      $region31: #{vae_forward.1} parent=11 // pred_region
        _
      $region32: #{vae_forward.1} parent=11 // pred_fallthru
        _
      // Predicated region
      $region33: #{vae_forward.1} parent=11 // pred_check
        %p462 = pneg %p202
      $region34: #{vae_forward.1} parent=11 // pred_check_branch
        %464 = sbr.rel (%p462) target = $region36
      $region35: #{vae_forward.1} parent=11 // pred_region
        _
      $region36: #{vae_forward.1} parent=11 // pred_fallthru
        _
      // Predicated region
      $region37: #{vae_forward.1} parent=11 // pred_check
        %p465 = pneg %p223
      $region38: #{vae_forward.1} parent=11 // pred_check_branch
        %467 = sbr.rel (%p465) target = $region40
      $region39: #{vae_forward.1} parent=11 // pred_region
        _
      $region40: #{vae_forward.1} parent=11 // pred_fallthru
        _
      // Predicated region
      $region41: #{vae_forward.1} parent=11 // pred_check
        %p468 = pneg %p244
      $region42: #{vae_forward.1} parent=11 // pred_check_branch
        %470 = sbr.rel (%p468) target = $region44
      $region43: #{vae_forward.1} parent=11 // pred_region
        _
      $region44: #{vae_forward.1} parent=11 // pred_fallthru
        _
      // Predicated region
      $region45: #{vae_forward.1} parent=11 // pred_check
        %p471 = pneg %p265
      $region46: #{vae_forward.1} parent=11 // pred_check_branch
        %473 = sbr.rel (%p471) target = $region48
      $region47: #{vae_forward.1} parent=11 // pred_region
        _
      $region48: #{vae_forward.1} parent=11 // pred_fallthru
        _
      // Predicated region
      $region49: #{vae_forward.1} parent=11 // pred_check
        %p474 = pneg %p286
      $region50: #{vae_forward.1} parent=11 // pred_check_branch
        %476 = sbr.rel (%p474) target = $region52
      $region51: #{vae_forward.1} parent=11 // pred_region
        _
      $region52: #{vae_forward.1} parent=11 // pred_fallthru
        _
      // Predicated region
      $region53: #{vae_forward.1} parent=11 // pred_check
        %p477 = pneg %p307
      $region54: #{vae_forward.1} parent=11 // pred_check_branch
        %479 = sbr.rel (%p477) target = $region56
      $region55: #{vae_forward.1} parent=11 // pred_region
        _
      $region56: #{vae_forward.1} parent=11 // pred_fallthru
        _
      // Predicated region
      $region57: #{vae_forward.1} parent=11 // pred_check
        %p480 = pneg %p328
      $region58: #{vae_forward.1} parent=11 // pred_check_branch
        %482 = sbr.rel (%p480) target = $region60
      $region59: #{vae_forward.1} parent=11 // pred_region
        _
      $region60: #{vae_forward.1} parent=11 // pred_fallthru
        _
    $region12: #{vae_forward.1} parent=5 // pred_fallthru
      _
    %p483 = scmp.lt.s32.totalorder %s24, 2
    // Predicated region
    $region61: #{vae_forward.1} parent=5 // pred_check
      %p484 = pneg %p483
    $region62: #{vae_forward.1} parent=5 // pred_check_branch
      %486 = sbr.rel (%p484) target = $region64
    $region63: #{vae_forward.1} parent=5 // pred_region
      // Predicated region
      $region65: #{vae_forward.1} parent=63 // pred_check
        %p487 = pneg %p44
      $region66: #{vae_forward.1} parent=63 // pred_check_branch
        %489 = sbr.rel (%p487) target = $region68
      $region67: #{vae_forward.1} parent=63 // pred_region
        %s490 = smul.u32 2, %s24
        %p491 = scmp.lt.s32.totalorder %s490, 3
        %s492 = scalar_select %p491, %s490, 3
        %s493 = smul.addr %s492, 8
        %s494 = scalar_lea.vmem %s0, %s493
        %s495 = smul.u32 2, %s24
      $region68: #{vae_forward.1} parent=63 // pred_fallthru
        _
      // Predicated region
      $region69: #{vae_forward.1} parent=63 // pred_check
        %p496 = pneg %p70
      $region70: #{vae_forward.1} parent=63 // pred_check_branch
        %498 = sbr.rel (%p496) target = $region72
      $region71: #{vae_forward.1} parent=63 // pred_region
        %s499 = smul.u32 2, %s24
        %p500 = scmp.lt.s32.totalorder %s499, 3
        %s501 = scalar_select %p500, %s499, 3
        %s502 = smul.addr %s501, 8
        %s503 = scalar_lea.vmem %s1, %s502
        %s504 = smul.u32 2, %s24
      $region72: #{vae_forward.1} parent=63 // pred_fallthru
        _
    $region64: #{vae_forward.1} parent=5 // pred_fallthru
      _
    %p505 = scmp.le.s32.totalorder 1, %s24
    %p506 = scmp.lt.s32.totalorder %s24, 3
    %p507 = pnand %p505, %p506
    %p508 = pneg %p507
    // Predicated region
    $region73: #{vae_forward.1} parent=5 // pred_check
      _
    $region74: #{vae_forward.1} parent=5 // pred_check_branch
      %510 = sbr.rel (%p507) target = $region76
    $region75: #{vae_forward.1} parent=5 // pred_region
      %s511 = ssub.s32 %s24, 1
      %s512 = smul.u32 2, %s29
      %p513 = scmp.lt.s32.totalorder %s512, 3
      %s514 = scalar_select %p513, %s512, 3
      %s515 = smul.addr %s514, 8
      %s516 = scalar_lea.vmem %s0, %s515
      %p517 = pneg %p50
      %p518 = pneg %p47
      %s519 = smul.u32 2, %s29
      %p520 = scmp.lt.s32.totalorder %s519, 3
      %s521 = scalar_select %p520, %s519, 3
      %s522 = smul.addr %s521, 8
      %s523 = scalar_lea.vmem %s1, %s522
      %p524 = pneg %p76
      %p525 = pneg %p73
      %p526 = pneg %p97
      %p527 = pneg %p94
      %p528 = pneg %p118
      %p529 = pneg %p115
      %p530 = pneg %p139
      %p531 = pneg %p136
      %p532 = pneg %p160
      %p533 = pneg %p157
      %p534 = pneg %p181
      %p535 = pneg %p178
      %p536 = pneg %p202
      %p537 = pneg %p199
      %p538 = pneg %p223
      %p539 = pneg %p220
      %p540 = pneg %p244
      %p541 = pneg %p241
      %p542 = pneg %p265
      %p543 = pneg %p262
      %p544 = pneg %p286
      %p545 = pneg %p283
      %p546 = pneg %p307
      %p547 = pneg %p304
      %p548 = pneg %p328
      %p549 = pneg %p325
      %p550 = pneg %p354
      %p551 = pneg %p351
      %s552 = smul.u32 2, %s29
      %p553 = scmp.lt.s32.totalorder %s552, 3
      %s554 = scalar_select %p553, %s552, 3
      %s555 = smul.addr %s554, 8
      %s556 = scalar_lea.vmem %s14, %s555
      %p557 = pneg %p380
      %p558 = pneg %p377
      %s559 = smul.u32 2, %s29
      %p560 = scmp.lt.s32.totalorder %s559, 3
      %s561 = scalar_select %p560, %s559, 3
      %s562 = smul.addr %s561, 8
      %s563 = scalar_lea.vmem %s15, %s562
      %p564 = pneg %p406
      %p565 = pneg %p403
      %s566 = smul.u32 2, %s29
      %p567 = scmp.lt.s32.totalorder %s566, 3
      %s568 = scalar_select %p567, %s566, 3
      %s569 = smul.addr %s568, 8
      %s570 = scalar_lea.vmem %s16, %s569
      %p571 = pneg %p432
      %p572 = pneg %p429
      %s573 = smul.u32 2, %s29
      %p574 = scmp.lt.s32.totalorder %s573, 3
      %s575 = scalar_select %p574, %s573, 3
      %s576 = smul.addr %s575, 8
      %s577 = scalar_lea.vmem %s17, %s576
      %s578 = smul.u32 2, %s29
      %p579 = scmp.lt.s32.totalorder %s578, 3
      %s580 = scalar_select %p579, %s578, 3
      %s581 = smul.addr %s580, 8
      %s582 = scalar_lea.vmem %s0, %s581
      %s583 = smul.u32 2, %s29
      %s584 = smul.u32 2, %s29
      %p585 = scmp.lt.s32.totalorder %s584, 3
      %s586 = scalar_select %p585, %s584, 3
      %s587 = smul.addr %s586, 8
      %s588 = scalar_lea.vmem %s1, %s587
      %s589 = smul.u32 2, %s29
      %s590 = smul.u32 2, %s29
      %p591 = scmp.lt.s32.totalorder %s590, 3
      %s592 = scalar_select %p591, %s590, 3
      %s593 = smul.addr %s592, 8
      %s594 = scalar_lea.vmem %s14, %s593
      %s595 = smul.u32 2, %s29
      %s596 = smul.u32 2, %s29
      %p597 = scmp.lt.s32.totalorder %s596, 3
      %s598 = scalar_select %p597, %s596, 3
      %s599 = smul.addr %s598, 8
      %s600 = scalar_lea.vmem %s15, %s599
      %s601 = smul.u32 2, %s29
      %s602 = smul.u32 2, %s29
      %p603 = scmp.lt.s32.totalorder %s602, 3
      %s604 = scalar_select %p603, %s602, 3
      %s605 = smul.addr %s604, 8
      %s606 = scalar_lea.vmem %s16, %s605
      %s607 = smul.u32 2, %s29
      %s608 = smul.u32 2, %s29
      %p609 = scmp.lt.s32.totalorder %s608, 3
      %s610 = scalar_select %p609, %s608, 3
      %s611 = smul.addr %s610, 8
      %s612 = scalar_lea.vmem %s17, %s611
      %s613 = smul.u32 2, %s29
      %v614 = vld [vmem:[%s582] sm:$0xff]
      %v615 = vld [vmem:[%s582 + $0x8] sm:$0xff]
      %v616 = vld [vmem:[%s2] sm:$0xff]
      %v617 = vld [vmem:[%s2 + $0x8] sm:$0xff]
      %v618 = vld [vmem:[%s2 + $0x10] sm:$0xff]
      %v619 = vld [vmem:[%s2 + $0x18] sm:$0xff]
      %v620 = vld [vmem:[%s3] sm:$0x1]
      %v622 = vperm.slane %v620, 0
      %vm624 = vcmask 261120
      %v626 = vsel %vm624, %v614, 0
      %v629 = vsel %vm624, %v615, 0
      %631 = vmatpush.msra.mxu0 0.0
      %632 = vmatpush.msra.mxu0 0.0
      %633 = vmatpush.msra.mxu0 0.0
      %634 = vmatpush.msra.mxu0 0.0
      %635 = vmatpush.msra.mxu0 0.0
      %636 = vmatpush.msra.mxu0 0.0
      %637 = vmatpush.msra.mxu0 0.0
      %638 = vmatpush.msra.mxu0 0.0
      %639 = vmatpush.msra.mxu0 0.0
      %640 = vmatpush.msra.mxu0 0.0
      %641 = vmatpush.msra.mxu0 0.0
      %642 = vmatpush.msra.mxu0 0.0
      %643 = vmatpush.msra.mxu0 %v619
      %644 = vmatpush.msra.mxu0 %v618
      %645 = vmatpush.msra.mxu0 %v617
      %646 = vmatpush.msra.mxu0 %v616
      %647 = vmatmul.f32.gmra.mxu0 %v626
      %v648 = vpop.f32.mrf.mxu0
      %v649 = vadd.f32 %v622, %v648
      %650 = vmatmul.f32.gmra.mxu0 %v629
      %v651 = vpop.f32.mrf.mxu0
      %v652 = vadd.f32 %v622, %v651
      %653 = vdwg.mxu0
      %v654 = vmax.f32 %v649, 0.0
      %v655 = vmax.f32 %v652, 0.0
      %v656 = vld [vmem:[%s4] sm:$0xff]
      %v657 = vld [vmem:[%s4 + $0x8] sm:$0xff]
      %v658 = vld [vmem:[%s4 + $0x10] sm:$0xff]
      %v659 = vld [vmem:[%s4 + $0x18] sm:$0xff]
      %v660 = vld [vmem:[%s4 + $0x20] sm:$0xff]
      %v661 = vld [vmem:[%s4 + $0x28] sm:$0xff]
      %v662 = vld [vmem:[%s4 + $0x30] sm:$0xff]
      %v663 = vld [vmem:[%s4 + $0x38] sm:$0xff]
      %v664 = vld [vmem:[%s4 + $0x40] sm:$0xff]
      %v665 = vld [vmem:[%s4 + $0x48] sm:$0xff]
      %v666 = vld [vmem:[%s4 + $0x50] sm:$0xff]
      %v667 = vld [vmem:[%s4 + $0x58] sm:$0xff]
      %v668 = vld [vmem:[%s4 + $0x60] sm:$0xff]
      %v669 = vld [vmem:[%s4 + $0x68] sm:$0xff]
      %v670 = vld [vmem:[%s4 + $0x70] sm:$0xff]
      %v671 = vld [vmem:[%s4 + $0x78] sm:$0xff]
      %v672 = vld [vmem:[%s5] sm:$0x1]
      %v674 = vperm.slane %v672, 0
      %676 = vmatpush.msra.mxu0 %v671
      %677 = vmatpush.msra.mxu0 %v670
      %678 = vmatpush.msra.mxu0 %v669
      %679 = vmatpush.msra.mxu0 %v668
      %680 = vmatpush.msra.mxu0 %v667
      %681 = vmatpush.msra.mxu0 %v666
      %682 = vmatpush.msra.mxu0 %v665
      %683 = vmatpush.msra.mxu0 %v664
      %684 = vmatpush.msra.mxu0 %v663
      %685 = vmatpush.msra.mxu0 %v662
      %686 = vmatpush.msra.mxu0 %v661
      %687 = vmatpush.msra.mxu0 %v660
      %688 = vmatpush.msra.mxu0 %v659
      %689 = vmatpush.msra.mxu0 %v658
      %690 = vmatpush.msra.mxu0 %v657
      %691 = vmatpush.msra.mxu0 %v656
      %692 = vmatmul.f32.gmra.mxu0 %v654
      %v693 = vpop.f32.mrf.mxu0
      %v694 = vadd.f32 %v674, %v693
      %695 = vmatmul.f32.gmra.mxu0 %v655
      %v696 = vpop.f32.mrf.mxu0
      %v697 = vadd.f32 %v674, %v696
      %698 = vdwg.mxu0
      %v699 = vmax.f32 %v694, 0.0
      %v700 = vmax.f32 %v697, 0.0
      %v701 = vld [vmem:[%s6] sm:$0xff]
      %v702 = vld [vmem:[%s6 + $0x8] sm:$0xff]
      %v703 = vld [vmem:[%s6 + $0x10] sm:$0xff]
      %v704 = vld [vmem:[%s6 + $0x18] sm:$0xff]
      %v705 = vld [vmem:[%s6 + $0x20] sm:$0xff]
      %v706 = vld [vmem:[%s6 + $0x28] sm:$0xff]
      %v707 = vld [vmem:[%s6 + $0x30] sm:$0xff]
      %v708 = vld [vmem:[%s6 + $0x38] sm:$0xff]
      %v709 = vld [vmem:[%s7] sm:$0x1]
      %v711 = vperm.slane %v709, 0
      %vm713 = vcmask 523264
      %v715 = vsel %vm713, %v699, 0
      %v718 = vsel %vm713, %v700, 0
      %720 = vmatpush.msra.mxu0 0.0
      %721 = vmatpush.msra.mxu0 0.0
      %722 = vmatpush.msra.mxu0 0.0
      %723 = vmatpush.msra.mxu0 0.0
      %724 = vmatpush.msra.mxu0 0.0
      %725 = vmatpush.msra.mxu0 0.0
      %726 = vmatpush.msra.mxu0 0.0
      %727 = vmatpush.msra.mxu0 0.0
      %728 = vmatpush.msra.mxu0 %v708
      %729 = vmatpush.msra.mxu0 %v707
      %730 = vmatpush.msra.mxu0 %v706
      %731 = vmatpush.msra.mxu0 %v705
      %732 = vmatpush.msra.mxu0 %v704
      %733 = vmatpush.msra.mxu0 %v703
      %734 = vmatpush.msra.mxu0 %v702
      %735 = vmatpush.msra.mxu0 %v701
      %736 = vmatmul.f32.gmra.mxu0 %v715
      %v737 = vpop.f32.mrf.mxu0
      %v738 = vadd.f32 %v711, %v737
      %739 = vmatmul.f32.gmra.mxu0 %v718
      %v740 = vpop.f32.mrf.mxu0
      %v741 = vadd.f32 %v711, %v740
      %742 = vdwg.mxu0
      %v743 = vmax.f32 %v738, -5.0
      %v744 = vmax.f32 %v741, -5.0
      %v745 = vmin.f32 %v743, 5.0
      %v746 = vmin.f32 %v744, 5.0
      %v747 = vmul.f32 %v745, 0.5
      %v748 = vmul.f32 %v746, 0.5
      %v749 = vmul.f32 %v747, 1.442695
      %v750 = vpow.pop %v749
      %v751 = vmul.f32 %v748, 1.442695
      %v752 = vpow.pop %v751
      %v753 = vld [vmem:[%s588] sm:$0xff]
      %v754 = vld [vmem:[%s588 + $0x8] sm:$0xff]
      %757 = vrot.lane.b32.xlu0 %v750, 123
      %v758 = vpop.permute.xlu0 %757
      %759 = vrot.lane.b32.xlu0 %v752, 123
      %v760 = vpop.permute.xlu0 %759
      %v763 = vmul.f32 %v753, %v758
      %v764 = vmul.f32 %v754, %v760
      %v765 = vadd.f32 %v738, %v763
      %v766 = vadd.f32 %v741, %v764
      %v767 = vld [vmem:[%s8] sm:$0x1f]
      %v768 = vld [vmem:[%s9] sm:$0x1]
      %v770 = vperm.slane %v768, 0
      %vm772 = vcmask 39936
      %v774 = vsel %vm772, %v765, 0
      %v777 = vsel %vm772, %v766, 0
      %vm779 = vcmask 1044480
      %v781 = vsel %vm779, %v767, 0
      %783 = vmatpush.msra.mxu0 0.0
      %784 = vmatpush.msra.mxu0 0.0
      %785 = vmatpush.msra.mxu0 0.0
      %786 = vmatpush.msra.mxu0 0.0
      %787 = vmatpush.msra.mxu0 0.0
      %788 = vmatpush.msra.mxu0 0.0
      %789 = vmatpush.msra.mxu0 0.0
      %790 = vmatpush.msra.mxu0 0.0
      %791 = vmatpush.msra.mxu0 0.0
      %792 = vmatpush.msra.mxu0 0.0
      %793 = vmatpush.msra.mxu0 0.0
      %794 = vmatpush.msra.mxu0 0.0
      %795 = vmatpush.msra.mxu0 0.0
      %796 = vmatpush.msra.mxu0 0.0
      %797 = vmatpush.msra.mxu0 0.0
      %798 = vmatpush.msra.mxu0 %v781
      %799 = vmatmul.f32.gmra.mxu0 %v774
      %v800 = vpop.f32.mrf.mxu0
      %v801 = vadd.f32 %v770, %v800
      %802 = vmatmul.f32.gmra.mxu0 %v777
      %v803 = vpop.f32.mrf.mxu0
      %v804 = vadd.f32 %v770, %v803
      %805 = vdwg.mxu0
      %v806 = vmax.f32 %v801, 0.0
      %v807 = vmax.f32 %v804, 0.0
      %v808 = vld [vmem:[%s10] sm:$0xff]
      %v809 = vld [vmem:[%s10 + $0x8] sm:$0xff]
      %v810 = vld [vmem:[%s10 + $0x10] sm:$0xff]
      %v811 = vld [vmem:[%s10 + $0x18] sm:$0xff]
      %v812 = vld [vmem:[%s10 + $0x20] sm:$0xff]
      %v813 = vld [vmem:[%s10 + $0x28] sm:$0xff]
      %v814 = vld [vmem:[%s10 + $0x30] sm:$0xff]
      %v815 = vld [vmem:[%s10 + $0x38] sm:$0xff]
      %v816 = vld [vmem:[%s11] sm:$0x1]
      %v818 = vperm.slane %v816, 0
      %v821 = vsel %vm713, %v806, 0
      %v824 = vsel %vm713, %v807, 0
      %826 = vmatpush.msra.mxu0 0.0
      %827 = vmatpush.msra.mxu0 0.0
      %828 = vmatpush.msra.mxu0 0.0
      %829 = vmatpush.msra.mxu0 0.0
      %830 = vmatpush.msra.mxu0 0.0
      %831 = vmatpush.msra.mxu0 0.0
      %832 = vmatpush.msra.mxu0 0.0
      %833 = vmatpush.msra.mxu0 0.0
      %834 = vmatpush.msra.mxu0 %v815
      %835 = vmatpush.msra.mxu0 %v814
      %836 = vmatpush.msra.mxu0 %v813
      %837 = vmatpush.msra.mxu0 %v812
      %838 = vmatpush.msra.mxu0 %v811
      %839 = vmatpush.msra.mxu0 %v810
      %840 = vmatpush.msra.mxu0 %v809
      %841 = vmatpush.msra.mxu0 %v808
      %842 = vmatmul.f32.gmra.mxu0 %v821
      %v843 = vpop.f32.mrf.mxu0
      %v844 = vadd.f32 %v818, %v843
      %845 = vmatmul.f32.gmra.mxu0 %v824
      %v846 = vpop.f32.mrf.mxu0
      %v847 = vadd.f32 %v818, %v846
      %848 = vdwg.mxu0
      %v849 = vmax.f32 %v844, 0.0
      %v850 = vmax.f32 %v847, 0.0
      %v851 = vld [vmem:[%s12] sm:$0xff]
      %v852 = vld [vmem:[%s12 + $0x8] sm:$0xff]
      %v853 = vld [vmem:[%s12 + $0x10] sm:$0xff]
      %v854 = vld [vmem:[%s12 + $0x18] sm:$0xff]
      %v855 = vld [vmem:[%s12 + $0x20] sm:$0xff]
      %v856 = vld [vmem:[%s12 + $0x28] sm:$0xff]
      %v857 = vld [vmem:[%s12 + $0x30] sm:$0xff]
      %v858 = vld [vmem:[%s12 + $0x38] sm:$0xff]
      %v859 = vld [vmem:[%s12 + $0x40] sm:$0xff]
      %v860 = vld [vmem:[%s12 + $0x48] sm:$0xff]
      %v861 = vld [vmem:[%s12 + $0x50] sm:$0xff]
      %v862 = vld [vmem:[%s12 + $0x58] sm:$0xff]
      %v863 = vld [vmem:[%s12 + $0x60] sm:$0xff]
      %v864 = vld [vmem:[%s12 + $0x68] sm:$0xff]
      %v865 = vld [vmem:[%s12 + $0x70] sm:$0xff]
      %v866 = vld [vmem:[%s12 + $0x78] sm:$0xff]
      %v867 = vld [vmem:[%s13] sm:$0x1]
      %v869 = vperm.slane %v867, 0
      %871 = vmatpush.msra.mxu0 %v866
      %872 = vmatpush.msra.mxu0 %v865
      %873 = vmatpush.msra.mxu0 %v864
      %874 = vmatpush.msra.mxu0 %v863
      %875 = vmatpush.msra.mxu0 %v862
      %876 = vmatpush.msra.mxu0 %v861
      %877 = vmatpush.msra.mxu0 %v860
      %878 = vmatpush.msra.mxu0 %v859
      %879 = vmatpush.msra.mxu0 %v858
      %880 = vmatpush.msra.mxu0 %v857
      %881 = vmatpush.msra.mxu0 %v856
      %882 = vmatpush.msra.mxu0 %v855
      %883 = vmatpush.msra.mxu0 %v854
      %884 = vmatpush.msra.mxu0 %v853
      %885 = vmatpush.msra.mxu0 %v852
      %886 = vmatpush.msra.mxu0 %v851
      %887 = vmatmul.f32.gmra.mxu0 %v849
      %v888 = vpop.f32.mrf.mxu0
      %v889 = vadd.f32 %v869, %v888
      %890 = vmatmul.f32.gmra.mxu0 %v850
      %v891 = vpop.f32.mrf.mxu0
      %v892 = vadd.f32 %v869, %v891
      %893 = vdwg.mxu0
      %894 = vst.msk [vmem:[%s594] sm:$0xff] %vm624, %v889
      %895 = vst.msk [vmem:[%s594 + $0x8] sm:$0xff] %vm624, %v892
      %896 = vst.msk [vmem:[%s600] sm:$0xff] %vm772, %v738
      %897 = vst.msk [vmem:[%s600 + $0x8] sm:$0xff] %vm772, %v741
      %900 = vrot.lane.b32.xlu0 %v745, 123
      %v901 = vpop.permute.xlu0 %900
      %902 = vrot.lane.b32.xlu0 %v746, 123
      %v903 = vpop.permute.xlu0 %902
      %906 = vst.msk [vmem:[%s606] sm:$0xff] %vm772, %v901
      %907 = vst.msk [vmem:[%s606 + $0x8] sm:$0xff] %vm772, %v903
      %908 = vst.msk [vmem:[%s612] sm:$0xff] %vm772, %v765
      %909 = vst.msk [vmem:[%s612 + $0x8] sm:$0xff] %vm772, %v766
      %s910 = smul.u32 2, %s29
      %p911 = scmp.lt.s32.totalorder %s910, 3
      %s912 = scalar_select %p911, %s910, 3
      %s913 = smul.addr %s912, 8
      %s914 = scalar_lea.vmem %s14, %s913
      %s915 = smul.u32 2, %s29
      %p916 = scmp.lt.s32.totalorder %s915, 3
      %s917 = scalar_select %p916, %s915, 3
      %s918 = smul.addr %s917, 8
      %s919 = scalar_lea.vmem %s15, %s918
      %s920 = smul.u32 2, %s29
      %p921 = scmp.lt.s32.totalorder %s920, 3
      %s922 = scalar_select %p921, %s920, 3
      %s923 = smul.addr %s922, 8
      %s924 = scalar_lea.vmem %s16, %s923
      %s925 = smul.u32 2, %s29
      %p926 = scmp.lt.s32.totalorder %s925, 3
      %s927 = scalar_select %p926, %s925, 3
      %s928 = smul.addr %s927, 8
      %s929 = scalar_lea.vmem %s17, %s928
      // Predicated region
      $region77: #{vae_forward.1} parent=75 // pred_check
        %p930 = pneg %p351
      $region78: #{vae_forward.1} parent=75 // pred_check_branch
        %932 = sbr.rel (%p930) target = $region80
      $region79: #{vae_forward.1} parent=75 // pred_region
        %s933 = smul.u32 2, %s29
      $region80: #{vae_forward.1} parent=75 // pred_fallthru
        _
      // Predicated region
      $region81: #{vae_forward.1} parent=75 // pred_check
        %p934 = pneg %p377
      $region82: #{vae_forward.1} parent=75 // pred_check_branch
        %936 = sbr.rel (%p934) target = $region84
      $region83: #{vae_forward.1} parent=75 // pred_region
        %s937 = smul.u32 2, %s29
      $region84: #{vae_forward.1} parent=75 // pred_fallthru
        _
      // Predicated region
      $region85: #{vae_forward.1} parent=75 // pred_check
        %p938 = pneg %p403
      $region86: #{vae_forward.1} parent=75 // pred_check_branch
        %940 = sbr.rel (%p938) target = $region88
      $region87: #{vae_forward.1} parent=75 // pred_region
        %s941 = smul.u32 2, %s29
      $region88: #{vae_forward.1} parent=75 // pred_fallthru
        _
      // Predicated region
      $region89: #{vae_forward.1} parent=75 // pred_check
        %p942 = pneg %p429
      $region90: #{vae_forward.1} parent=75 // pred_check_branch
        %944 = sbr.rel (%p942) target = $region92
      $region91: #{vae_forward.1} parent=75 // pred_region
        %s945 = smul.u32 2, %s29
      $region92: #{vae_forward.1} parent=75 // pred_fallthru
        _
    $region76: #{vae_forward.1} parent=5 // pred_fallthru
      _
    %p946 = scmp.le.s32.totalorder 2, %s24
    // Predicated region
    $region93: #{vae_forward.1} parent=5 // pred_check
      %p947 = pneg %p946
    $region94: #{vae_forward.1} parent=5 // pred_check_branch
      %949 = sbr.rel (%p947) target = $region96
    $region95: #{vae_forward.1} parent=5 // pred_region
      %s950 = ssub.s32 %s24, 2
      // Predicated region
      $region97: #{vae_forward.1} parent=95 // pred_check
        %p951 = pneg %p357
      $region98: #{vae_forward.1} parent=95 // pred_check_branch
        %953 = sbr.rel (%p951) target = $region100
      $region99: #{vae_forward.1} parent=95 // pred_region
        %s954 = smul.u32 2, %s30
        %p955 = scmp.lt.s32.totalorder %s954, 3
        %s956 = scalar_select %p955, %s954, 3
        %s957 = smul.addr %s956, 8
        %s958 = scalar_lea.vmem %s14, %s957
      $region100: #{vae_forward.1} parent=95 // pred_fallthru
        _
      // Predicated region
      $region101: #{vae_forward.1} parent=95 // pred_check
        %p959 = pneg %p383
      $region102: #{vae_forward.1} parent=95 // pred_check_branch
        %961 = sbr.rel (%p959) target = $region104
      $region103: #{vae_forward.1} parent=95 // pred_region
        %s962 = smul.u32 2, %s30
        %p963 = scmp.lt.s32.totalorder %s962, 3
        %s964 = scalar_select %p963, %s962, 3
        %s965 = smul.addr %s964, 8
        %s966 = scalar_lea.vmem %s15, %s965
      $region104: #{vae_forward.1} parent=95 // pred_fallthru
        _
      // Predicated region
      $region105: #{vae_forward.1} parent=95 // pred_check
        %p967 = pneg %p409
      $region106: #{vae_forward.1} parent=95 // pred_check_branch
        %969 = sbr.rel (%p967) target = $region108
      $region107: #{vae_forward.1} parent=95 // pred_region
        %s970 = smul.u32 2, %s30
        %p971 = scmp.lt.s32.totalorder %s970, 3
        %s972 = scalar_select %p971, %s970, 3
        %s973 = smul.addr %s972, 8
        %s974 = scalar_lea.vmem %s16, %s973
      $region108: #{vae_forward.1} parent=95 // pred_fallthru
        _
      // Predicated region
      $region109: #{vae_forward.1} parent=95 // pred_check
        %p975 = pneg %p435
      $region110: #{vae_forward.1} parent=95 // pred_check_branch
        %977 = sbr.rel (%p975) target = $region112
      $region111: #{vae_forward.1} parent=95 // pred_region
        %s978 = smul.u32 2, %s30
        %p979 = scmp.lt.s32.totalorder %s978, 3
        %s980 = scalar_select %p979, %s978, 3
        %s981 = smul.addr %s980, 8
        %s982 = scalar_lea.vmem %s17, %s981
      $region112: #{vae_forward.1} parent=95 // pred_fallthru
        _
    $region96: #{vae_forward.1} parent=5 // pred_fallthru
      _
  $region6: #{vae_forward.1} parent=0 // loop_footer
    %s28 = sadd.s32 1, %s24
  $region7: #{vae_forward.1} parent=0 // loop_footer_branch
    %23 = sbr.rel target = $region3
  $region8: #{vae_forward.1} parent=0 // loop_exit
    _

</llo_original>
